<compile_context>
chip_gen: v7x
topology: tpu7x:2x2x1
jax: 0.10.0
libtpu: 0.0.40
codegen_flags: <defaults>
</compile_context>

<pallas_src>
import functools

import jax
import jax.numpy as jnp
from jax.experimental import pallas as pl
from jax.experimental.pallas import tpu as pltpu


def _relu_and_sigmoid_kernel(x_ref, o_ref, *, C, rows_per_block, min_val, range_val):
    # x_ref / o_ref: (rows_per_block, cols_per_block) tile of the flat
    # (N*C, H*W) view.  Row r of the flat view is channel (r % C).
    x = x_ref[...].astype(jnp.float32)

    row0 = pl.program_id(0) * rows_per_block
    rows = row0 + jax.lax.broadcasted_iota(jnp.int32, x.shape, 0)
    is_relu_row = (rows % C) == 0

    relu_out = jnp.maximum(x, 0.0)
    # sigmoid(k*x) * range + min  ==  range / (1 + exp(-k*x)) + min
    k = 4.0 / range_val
    sig_out = range_val / (1.0 + jnp.exp(-k * x)) + min_val

    o_ref[...] = jnp.where(is_relu_row, relu_out, sig_out).astype(o_ref.dtype)


def _choose_block(rows_total, cols_total, itemsize, target_bytes=2 << 20):
    """Pick a (rows, cols) block: lane-dense, rows multiple of 8, ~target_bytes."""
    row_bytes = cols_total * itemsize
    if row_bytes * min(rows_total, 8) <= target_bytes:
        # Keep the full lane dim; tile over rows only.
        rows = target_bytes // row_bytes
        if rows >= rows_total:
            return rows_total, cols_total
        return max(8, (rows // 8) * 8), cols_total
    # Very large spatial planes: also tile the lane dim (multiple of 128).
    rows = min(rows_total, 8)
    cols = max(128, (target_bytes // (rows * itemsize) // 128) * 128)
    cols = min(cols, cols_total)
    return rows, cols


def relu_and_sigmoid(x, *, min_val: float = 0.0, max_val: float = 1.0):
    """x: (N, C, H, W). Returns array of same shape/dtype."""
    N, C, H, W = x.shape
    range_val = float(max_val - min_val)
    if range_val == 0.0:
        raise ValueError("ReLUAndSigmoid requires max != min (range == 0).")

    rows_total = N * C
    cols_total = H * W
    x_flat = x.reshape(rows_total, cols_total)  # free (contiguous) reshape

    itemsize = jnp.dtype(x.dtype).itemsize
    rows_blk, cols_blk = _choose_block(rows_total, cols_total, itemsize)
    grid = (pl.cdiv(rows_total, rows_blk), pl.cdiv(cols_total, cols_blk))

    kernel = functools.partial(
        _relu_and_sigmoid_kernel,
        C=C,
        rows_per_block=rows_blk,
        min_val=float(min_val),
        range_val=range_val,
    )

    out_flat = pl.pallas_call(
        kernel,
        out_shape=jax.ShapeDtypeStruct((rows_total, cols_total), x.dtype),
        grid=grid,
        in_specs=[pl.BlockSpec((rows_blk, cols_blk), lambda i, j: (i, j))],
        out_specs=pl.BlockSpec((rows_blk, cols_blk), lambda i, j: (i, j)),
        compiler_params=pltpu.CompilerParams(
            dimension_semantics=("parallel", "parallel"),
        ),
    )(x_flat)

    return out_flat.reshape(N, C, H, W)


def _reference(x, min_val=0.0, max_val=1.0):
    range_val = max_val - min_val
    x0 = jnp.maximum(x[:, :1, :, :], 0.0)
    x1 = jax.nn.sigmoid(x[:, 1:, :, :] * (4.0 / range_val)) * range_val + min_val
    return jnp.concatenate([x0, x1], axis=1)


if __name__ == "__main__":
    key = jax.random.PRNGKey(0)
    # Small NCHW input consistent with the module's forward (needs C >= 2).
    x = jax.random.normal(key, (2, 4, 16, 16), dtype=jnp.float32)

    out = relu_and_sigmoid(x, min_val=0.0, max_val=1.0)
    out = jax.block_until_ready(out)

    ref = _reference(x, 0.0, 1.0)
    assert out.shape == x.shape and out.dtype == x.dtype
    assert jnp.allclose(out, ref, atol=1e-5, rtol=1e-5), "mismatch vs reference"

    print("KERNEL_OK")
</pallas_src>

<mosaic_0001>
module attributes {stable_mosaic.version = 11 : i64} {
  func.func @_relu_and_sigmoid_kernel(%arg0: i32, %arg1: i32, %arg2: memref<8x256xf32, #tpu.memory_space<vmem>>, %arg3: memref<8x256xf32, #tpu.memory_space<vmem>>) attributes {dimension_semantics = [#tpu.dimension_semantics<parallel>, #tpu.dimension_semantics<parallel>], iteration_bounds = array<i64: 1, 1>, scalar_prefetch = 0 : i64, scratch_operands = 0 : i64, tpu.core_type = #tpu.core_type<tc>, window_params = [{transform_indices = @transform_0, window_bounds = array<i64: 8, 256>}, {transform_indices = @transform_1, window_bounds = array<i64: 8, 256>}]} {
    %c0 = arith.constant 0 : index
    %c0_0 = arith.constant 0 : index
    %0 = vector.load %arg2[%c0, %c0_0] : memref<8x256xf32, #tpu.memory_space<vmem>>, vector<8x256xf32>
    %c8_i32 = arith.constant 8 : i32
    %1 = arith.muli %arg0, %c8_i32 : i32
    %2 = tpu.iota {dimensions = array<i32: 0>} : vector<8x256xi32>
    %3 = vector.broadcast %1 : i32 to vector<8x256xi32>
    %4 = arith.addi %3, %2 : vector<8x256xi32>
    %c4_i32 = arith.constant 4 : i32
    %c0_i32 = arith.constant 0 : i32
    %5 = arith.cmpi eq, %c4_i32, %c0_i32 : i32
    %c1_i32 = arith.constant 1 : i32
    %6 = arith.select %5, %c1_i32, %c4_i32 : i32
    %7 = vector.broadcast %6 : i32 to vector<8x256xi32>
    %8 = arith.remsi %4, %7 : vector<8x256xi32>
    %c0_i32_1 = arith.constant 0 : i32
    %9 = vector.broadcast %c0_i32_1 : i32 to vector<8x256xi32>
    %10 = arith.cmpi ne, %8, %9 : vector<8x256xi32>
    %c0_i32_2 = arith.constant 0 : i32
    %11 = vector.broadcast %c0_i32_2 : i32 to vector<8x256xi32>
    %12 = arith.cmpi slt, %8, %11 : vector<8x256xi32>
    %c0_i32_3 = arith.constant 0 : i32
    %13 = arith.cmpi slt, %6, %c0_i32_3 : i32
    %14 = vector.broadcast %13 : i1 to vector<8x256xi1>
    %15 = vector.broadcast %14 : vector<8x256xi1> to vector<8x256xi1>
    %16 = arith.xori %12, %15 : vector<8x256xi1>
    %17 = arith.andi %16, %10 : vector<8x256xi1>
    %18 = vector.broadcast %6 : i32 to vector<8x256xi32>
    %19 = arith.addi %8, %18 : vector<8x256xi32>
    %20 = arith.select %17, %19, %8 : vector<8x256xi1>, vector<8x256xi32>
    %c0_i32_4 = arith.constant 0 : i32
    %21 = vector.broadcast %c0_i32_4 : i32 to vector<8x256xi32>
    %22 = arith.cmpi eq, %20, %21 : vector<8x256xi32>
    %cst = arith.constant 0.000000e+00 : f32
    %23 = vector.broadcast %cst : f32 to vector<8x256xf32>
    %24 = arith.maximumf %0, %23 : vector<8x256xf32>
    %cst_5 = arith.constant -4.000000e+00 : f32
    %25 = vector.broadcast %cst_5 : f32 to vector<8x256xf32>
    %26 = arith.mulf %25, %0 : vector<8x256xf32>
    %27 = math.exp %26 : vector<8x256xf32>
    %cst_6 = arith.constant 1.000000e+00 : f32
    %28 = vector.broadcast %cst_6 : f32 to vector<8x256xf32>
    %29 = arith.addf %28, %27 : vector<8x256xf32>
    %cst_7 = arith.constant 1.000000e+00 : f32
    %30 = vector.broadcast %cst_7 : f32 to vector<8x256xf32>
    %31 = arith.divf %30, %29 : vector<8x256xf32>
    %cst_8 = arith.constant 0.000000e+00 : f32
    %32 = vector.broadcast %cst_8 : f32 to vector<8x256xf32>
    %33 = arith.addf %31, %32 : vector<8x256xf32>
    %34 = arith.select %22, %24, %33 : vector<8x256xi1>, vector<8x256xf32>
    %c0_9 = arith.constant 0 : index
    %c0_10 = arith.constant 0 : index
    %35 = vector.load %arg3[%c0_9, %c0_10] : memref<8x256xf32, #tpu.memory_space<vmem>>, vector<8x256xf32>
    tpu.vector_store %arg3[%c0_9, %c0_10], %34 {strides = array<i32>} : memref<8x256xf32, #tpu.memory_space<vmem>>, vector<8x256xf32>,
    return
  }
  func.func @transform_0(%arg0: i32, %arg1: i32) -> (i32, i32) {
    %c0_i32 = arith.constant 0 : i32
    return %arg0, %arg1 : i32, i32
  }
  func.func @transform_1(%arg0: i32, %arg1: i32) -> (i32, i32) {
    %c0_i32 = arith.constant 0 : i32
    return %arg0, %arg1 : i32, i32
  }
}

</mosaic_0001>

<llo_original>
// kernel: tpu_custom_call.1
$region0: #{tpu_custom_call.1}
  #allocation0 [shape = 'u32[]', space=smem, size = 0x4, offset = 0x4, fixed_abs, tag = 'smem constant byte address 0x4 - core index']
  #allocation1 [shape = 'u32[144,128]{1,0:T(1,128)}', space=vmem, size = 0x12000, scoped, tag = 'internal scratch']
  %s0 = inlined_call_operand.hbm [shape: f32[8,256], index: 0, kind: input, shape index: {}]
  %s1 = inlined_call_operand.hbm [shape: f32[8,256], index: 1, kind: output, shape index: {}]
  %s2 = sld [smem:[#allocation0]]
  $region18: #{tpu_custom_call.1} parent=0
    _
  %s4 = ssub.s32 1, %s2
  %s5 = scalar_select 0, %s4, %s2
  $region1: #{tpu_custom_call.1} parent=0
    #allocation2 [shape = 'u8[8192]{0}', space=vmem, size = 0x2000, scoped, tag = 'input window, operand 0, single buffered']
    #allocation3 [shape = 's32[1]{0}', space=sflag, size = 0x4, scoped, tag = 'scoped memory for tpu_custom_call.1']
    #allocation4 [shape = 's32[1]{0}', space=sflag, size = 0x4, scoped, tag = 'scoped memory for tpu_custom_call.1']
    #allocation5 [shape = 'u8[8192]{0}', space=vmem, size = 0x2000, scoped, tag = 'output window, operand 0, single buffered']
    %6 = vsyncpa [#allocation3], 0
    %7 = vsyncpa [#allocation4], 0
    // Predicated region
    $region2: #{tpu_custom_call.1} parent=1 // pred_check
      _
    $region3: #{tpu_custom_call.1} parent=1 // pred_check_branch
      %9 = sbr.rel (0) target = $region5
    $region4: #{tpu_custom_call.1} parent=1 // pred_region
      %s11 = ssub.s32 256, 256
      %12 = vsyncadd [#allocation3], %s11
      %s14 = sshll.u32 [#allocation2], 4
      %s15 = int_to_ptr.vmem [resolvable:$true] %s14
      %17 = dma.hbm_to_vmem [thread:$0]  %s0, 256, %s15, [#allocation3]
    $region5: #{tpu_custom_call.1} parent=1 // pred_fallthru
      _
    // Predicated region
    $region6: #{tpu_custom_call.1} parent=1 // pred_check
      _
    $region7: #{tpu_custom_call.1} parent=1 // pred_check_branch
      %19 = sbr.rel (0) target = $region9
    $region8: #{tpu_custom_call.1} parent=1 // pred_region
      %20 = dma.done [#allocation3], 256
    $region9: #{tpu_custom_call.1} parent=1 // pred_fallthru
      _
    %v21 = vld [vmem:[#allocation2] sm:$0xff]
    %v22 = vld [vmem:[#allocation2 + $0x8] sm:$0xff]
    %s23 = smul.u32 0, 8
    %v24 = vlaneseq
    %v25 = vshrl.u32 %v24, 7
    %v26 = vstv %s23
    %v27 = vadd.s32 %v26, %v25
    %vm28 = vcmp.lt.s32.totalorder %v27, 0
    %v29 = vsub.s32 0, %v27
    %v30 = vsel %vm28, %v29, %v27
    %v31 = vshrl.u32 %v30, 2
    %v32 = vand.u32 %v30, 3
    %v33 = vsub.s32 0, %v32
    %v34 = vsel %vm28, %v33, %v32
    %vm35 = vcmp.ne.s32.totalorder %v34, 0
    %vm36 = vcmp.lt.s32.totalorder %v34, 0
    %vm37 = vmand %vm36, %vm35
    %v38 = vadd.s32 %v34, 4
    %v39 = vsel %vm37, %v38, %v34
    %vm40 = vcmp.eq.s32.totalorder %v39, 0
    %v41 = vmax.f32 %v21, 0.0
    %v42 = vmax.f32 %v22, 0.0
    %v43 = vmul.f32 %v21, -4.0
    %v44 = vmul.f32 %v22, -4.0
    %v45 = vmul.f32 %v43, 1.442695
    %v46 = vpow.pop %v45
    %v47 = vmul.f32 %v44, 1.442695
    %v48 = vpow.pop %v47
    %v49 = vadd.f32 %v46, 1.0
    %v50 = vadd.f32 %v48, 1.0
    %v51 = vrcp.pop %v49
    %v52 = vmul.f32 1.0, %v51
    %v53 = vrcp.pop %v50
    %v54 = vmul.f32 1.0, %v53
    %v55 = vadd.f32 %v52, 0.0
    %v56 = vadd.f32 %v54, 0.0
    %v57 = vsel %vm40, %v41, %v55
    %v58 = vsel %vm40, %v42, %v56
    %59 = vst [vmem:[#allocation5] sm:$0xff] %v57
    %60 = vst [vmem:[#allocation5 + $0x8] sm:$0xff] %v58
    // Predicated region
    $region10: #{tpu_custom_call.1} parent=1 // pred_check
      _
    $region11: #{tpu_custom_call.1} parent=1 // pred_check_branch
      %62 = sbr.rel (0) target = $region13
    $region12: #{tpu_custom_call.1} parent=1 // pred_region
      %s64 = ssub.s32 256, 256
      %65 = vsyncadd [#allocation4], %s64
      %s67 = sshll.u32 [#allocation5], 4
      %s68 = int_to_ptr.vmem [resolvable:$true] %s67
      %70 = dma.vmem_to_hbm [thread:$0]  %s68, 256, %s1, [#allocation4]
    $region13: #{tpu_custom_call.1} parent=1 // pred_fallthru
      _
    // Predicated region
    $region14: #{tpu_custom_call.1} parent=1 // pred_check
      _
    $region15: #{tpu_custom_call.1} parent=1 // pred_check_branch
      %72 = sbr.rel (0) target = $region17
    $region16: #{tpu_custom_call.1} parent=1 // pred_region
      %73 = dma.done [#allocation4], 256
    $region17: #{tpu_custom_call.1} parent=1 // pred_fallthru
      _
    %74 = vsyncpa [#allocation3], 1
    %75 = vsyncpa [#allocation4], 1

</llo_original>
